<compile_context>
chip_gen: v7x
topology: tpu7x:2x2x1
jax: 0.10.0
libtpu: 0.0.40
codegen_flags: <defaults>
</compile_context>

<pallas_src>
import jax
import jax.numpy as jnp
import numpy as np
from jax.experimental import pallas as pl
from jax.experimental.pallas import tpu as pltpu

TAU_MIN = 0.01
TAU_MAX = 2.0


# ----------------------------------------------------------------------------- kernels

def _finish(p, b1_ref, w2_ref, b2_ref, wl_ref, sc_ref):
    """From the (already L2-normalized) first projection p = xn @ W1^T to tau."""
    H = w2_ref.shape[1]

    # proj[0] bias + Sigmoid
    h = jax.nn.sigmoid(p + b1_ref[...])                                  # (tb, H) f32

    # proj[3]: Linear(H, H)   (Dropout identity in eval; w2_ref is W2^T, (H, H))
    h2 = jnp.dot(h.astype(w2_ref.dtype), w2_ref[...],
                 preferred_element_type=jnp.float32) + b2_ref[...]

    # weights = softmax(h2 * exp(-scaler), dim=1); exp(-scaler) precomputed (SMEM)
    logits = h2 * sc_ref[0]
    m = jnp.max(logits, axis=1, keepdims=True)
    e = jnp.exp(logits - m)
    denom = jnp.sum(e, axis=1, keepdims=True)
    r = pl.reciprocal(denom, approx=True)            # EUP slot
    r = r * (2.0 - denom * r)                        # one Newton step -> ~f32 accuracy
    weights = e * r

    # last: Linear(H, 1) as multiply + row-sum (no degenerate N=1 MXU matmul)
    xd = jnp.sum((weights - 1.0 / H) * h2 * wl_ref[...],
                 axis=1, keepdims=True) + sc_ref[1]

    return (TAU_MAX - TAU_MIN) * jax.nn.sigmoid(xd) + TAU_MIN


def _tempnet_resident_kernel(x_ref, w1_ref, w2_ref, b1_ref, b2_ref, wl_ref,
                             sc_ref, out_ref):
    """Resident-W1 recipe (v5e/v6e): x streamed in (tile_b, F) tiles, W1^T kept in VMEM."""
    x = x_ref[...]                                    # (tb, F) straight off HBM (bf16/f32)
    xf = x.astype(jnp.float32)
    ss = jnp.sum(xf * xf, axis=1, keepdims=True)      # ||x||^2 per row, f32

    # normalize folded into the matmul epilogue (per-row scale commutes with the matmul)
    p = jnp.dot(x.astype(w1_ref.dtype), w1_ref[...],
                preferred_element_type=jnp.float32)   # (tb, H) f32 acc
    p = p * jax.lax.rsqrt(jnp.maximum(ss, 1e-24))     # matches F.normalize eps=1e-12

    out_ref[...] = _finish(p, b1_ref, w2_ref, b2_ref, wl_ref, sc_ref).astype(out_ref.dtype)


def _tempnet_ktiled_kernel(x_ref, w1_ref, w2_ref, b1_ref, b2_ref, wl_ref,
                           sc_ref, out_ref, acc_ref, ss_ref):
    """K-tiled recipe (v7x / huge F): accumulate x@W1 and ||x||^2 over feature chunks."""
    k = pl.program_id(1)

    @pl.when(k == 0)
    def _():
        acc_ref[...] = jnp.zeros_like(acc_ref)
        ss_ref[...] = jnp.zeros_like(ss_ref)

    x = x_ref[...]                                    # (tb, tk)
    xf = x.astype(jnp.float32)
    ss_ref[...] += jnp.sum(xf * xf, axis=1, keepdims=True)
    acc_ref[...] += jnp.dot(x.astype(w1_ref.dtype), w1_ref[...],
                            preferred_element_type=jnp.float32)

    @pl.when(k == pl.num_programs(1) - 1)
    def _():
        p = acc_ref[...] * jax.lax.rsqrt(jnp.maximum(ss_ref[...], 1e-24))
        out_ref[...] = _finish(p, b1_ref, w2_ref, b2_ref, wl_ref,
                               sc_ref).astype(out_ref.dtype)


# ----------------------------------------------------------------------------- wrapper

def _round_up(n, m):
    return ((n + m - 1) // m) * m


def tempnet_forward(x, params, *, tile_b=None, tile_k=None,
                    x_dtype=jnp.bfloat16, matmul_dtype=jnp.bfloat16,
                    vmem_limit_bytes=None):
    """TempNet forward.  Default recipe: bf16 x stream + resident bf16 W1^T (v5e/v6e).
    Pass tile_k (multiple of 128 dividing F) to use the K-tiled recipe (v7x / huge F)."""
    B, F = x.shape
    H = params["w1"].shape[0]

    x_bytes = jnp.dtype(x_dtype).itemsize
    w_bytes = jnp.dtype(matmul_dtype).itemsize
    row_mult = {1: 32, 2: 16, 4: 8}[x_bytes]          # sublane packing multiple

    use_ktiled = (tile_k is not None) and (tile_k < F)
    if use_ktiled and (F % tile_k != 0 or tile_k % 128 != 0):
        raise ValueError("tile_k must divide F and be a multiple of 128")

    # ---- batch tile size: auto-size against a VMEM budget if not given --------------
    if tile_b is None:
        budget = vmem_limit_bytes or (96 << 20)
        if use_ktiled:
            resident = H * H * w_bytes + 4 * H * 4
            per_row = 2 * tile_k * x_bytes + tile_k * 4 + 20 * H * 4 + 16
        else:
            resident = (F * H + H * H) * w_bytes + 4 * H * 4
            per_row = 2 * F * x_bytes + F * 4 + 20 * H * 4 + 16
        avail = max(budget - resident, per_row * row_mult)
        tile_b = max(row_mult, min(1024, avail // per_row))
        if tile_b >= 128:
            tile_b = (tile_b // 128) * 128             # full-width MXU M passes
    tile_b = int(_round_up(min(int(tile_b), _round_up(B, row_mult)), row_mult))
    grid_b = pl.cdiv(B, tile_b)                        # ragged tail handled by masking

    # ---- explicit scoped-VMEM limit (defaults are 16/32 MiB and too small at F=32000)
    if vmem_limit_bytes is None:
        if use_ktiled:
            est = (H * H * w_bytes + 4 * H * 4
                   + 2 * (tile_b * tile_k * x_bytes + tile_k * H * w_bytes)
                   + tile_b * (tile_k * 4 + 24 * H * 4 + 16))
        else:
            est = ((F * H + H * H) * w_bytes + 4 * H * 4
                   + 2 * tile_b * F * x_bytes
                   + tile_b * (F * 4 + 24 * H * 4 + 16))
        vmem_limit_bytes = max(32 << 20, min(int(1.4 * est) + (4 << 20), 127 << 20))

    # ---- layout plumbing hoisted out of the kernel -----------------------------------
    w1t = params["w1"].T.astype(matmul_dtype)          # (F, H)
    w2t = params["w2"].T.astype(matmul_dtype)          # (H, H)
    b1 = params["b1"].reshape(1, H).astype(jnp.float32)
    b2 = params["b2"].reshape(1, H).astype(jnp.float32)
    wl = params["wl"].reshape(1, H).astype(jnp.float32)
    # exp(-scaler) precomputed; packed with last.bias as SMEM scalars [inv_temp, bl]
    scalars = jnp.concatenate([
        jnp.exp(-params["scaler"].reshape(1)),
        params["bl"].reshape(1)]).astype(jnp.float32)

    # Callers should pass bf16 x to avoid this extra HBM copy; cast only if needed.
    xs = x if x.dtype == jnp.dtype(x_dtype) else x.astype(x_dtype)

    vmem_full = pl.BlockSpec(memory_space=pltpu.MemorySpace.VMEM)   # resident, 1 buffer
    smem_full = pl.BlockSpec(memory_space=pltpu.MemorySpace.SMEM)

    if use_ktiled:
        kernel = _tempnet_ktiled_kernel
        grid = (grid_b, F // tile_k)
        in_specs = [
            pl.BlockSpec((tile_b, tile_k), lambda i, k: (i, k)),    # x: streamed
            pl.BlockSpec((tile_k, H), lambda i, k: (k, 0)),         # W1^T chunk
            vmem_full, vmem_full, vmem_full, vmem_full,             # W2^T, b1, b2, wl
            smem_full,                                              # [exp(-scaler), bl]
        ]
        out_specs = pl.BlockSpec((tile_b, 1), lambda i, k: (i, 0))
        scratch = [pltpu.VMEM((tile_b, H), jnp.float32),            # x@W1 accumulator
                   pltpu.VMEM((tile_b, 1), jnp.float32)]            # ||x||^2 accumulator
        semantics = ("parallel", "arbitrary")
    else:
        kernel = _tempnet_resident_kernel
        grid = (grid_b,)
        in_specs = [
            pl.BlockSpec((tile_b, F), lambda i: (i, 0)),            # x: streamed
            vmem_full, vmem_full, vmem_full, vmem_full, vmem_full,  # W1^T, W2^T, b1, b2, wl
            smem_full,                                              # [exp(-scaler), bl]
        ]
        out_specs = pl.BlockSpec((tile_b, 1), lambda i: (i, 0))
        scratch = []
        semantics = ("parallel",)

    out = pl.pallas_call(
        kernel,
        out_shape=jax.ShapeDtypeStruct((B, 1), jnp.float32),
        grid=grid,
        in_specs=in_specs,
        out_specs=out_specs,
        scratch_shapes=scratch,
        compiler_params=pltpu.CompilerParams(
            dimension_semantics=semantics,
            vmem_limit_bytes=int(vmem_limit_bytes)),
    )(xs, w1t, w2t, b1, b2, wl, scalars)
    return out


# ----------------------------------------------------------------------------- reference

def tempnet_reference(x, params):
    """Pure-JAX reference matching the PyTorch module (eval mode)."""
    H = params["w2"].shape[0]
    norm = jnp.sqrt(jnp.sum(x * x, axis=1, keepdims=True))
    xn = x / jnp.maximum(norm, 1e-12)
    h = jax.nn.sigmoid(xn @ params["w1"].T + params["b1"])
    h2 = h @ params["w2"].T + params["b2"]
    logits = h2 / jnp.exp(params["scaler"][0])
    weights = jax.nn.softmax(logits, axis=1)
    xd = ((weights - 1.0 / H) * h2) @ params["wl"].T + params["bl"][0]
    return (TAU_MAX - TAU_MIN) * jax.nn.sigmoid(xd) + TAU_MIN


def init_params(key, feature_dim, hid_size):
    k1, k2, k3, k4 = jax.random.split(key, 4)
    w1 = jax.random.normal(k1, (hid_size, feature_dim), jnp.float32) / np.sqrt(feature_dim)
    b1 = jax.random.normal(k2, (1, hid_size), jnp.float32) * 0.01
    w2 = jax.random.normal(k3, (hid_size, hid_size), jnp.float32) / np.sqrt(hid_size)
    b2 = jax.random.normal(k4, (1, hid_size), jnp.float32) * 0.01
    # self.scaler = log(1.0); self.last.weight = 1.0; self.last.bias = 0.0
    scaler = jnp.array([np.log(1.0)], dtype=jnp.float32)
    wl = jnp.ones((1, hid_size), jnp.float32)
    bl = jnp.zeros((1,), jnp.float32)
    return {"w1": w1, "b1": b1, "w2": w2, "b2": b2,
            "scaler": scaler, "wl": wl, "bl": bl}


if __name__ == "__main__":
    # Small stand-ins for the real (feature_dim=32000, hid_size=256) module.
    B, FEATURE_DIM, HID_SIZE = 60, 256, 128

    key = jax.random.PRNGKey(0)
    kx, kp = jax.random.split(key)
    x = jax.random.normal(kx, (B, FEATURE_DIM), jnp.float32)
    params = init_params(kp, FEATURE_DIM, HID_SIZE)

    tau_ref = tempnet_reference(x, params)

    # 1) Default production recipe for v5e/v6e: bf16 x stream + resident bf16 weights,
    #    auto-sized tile_b, explicit vmem limit.
    tau = jax.block_until_ready(tempnet_forward(x, params))
    assert tau.shape == (B, 1)
    np.testing.assert_allclose(np.asarray(tau), np.asarray(tau_ref), rtol=3e-2, atol=3e-2)

    # 2) f32 path with a small tile: exercises a multi-step batch grid and the ragged
    #    (masked) last tile; tight tolerance checks the math.
    tau_f32 = jax.block_until_ready(
        tempnet_forward(x, params, tile_b=16,
                        x_dtype=jnp.float32, matmul_dtype=jnp.float32))
    np.testing.assert_allclose(np.asarray(tau_f32), np.asarray(tau_ref), rtol=3e-4, atol=3e-4)

    # 3) K-tiled recipe (v7x / huge-F fit): feature axis split into 128-wide chunks,
    #    f32 accumulator + ||x||^2 scratch, normalize applied at the last K step.
    tau_kt = jax.block_until_ready(tempnet_forward(x, params, tile_b=16, tile_k=128))
    np.testing.assert_allclose(np.asarray(tau_kt), np.asarray(tau_ref), rtol=3e-2, atol=3e-2)

    print("KERNEL_OK")
</pallas_src>

<mosaic_0001>
module attributes {stable_mosaic.version = 11 : i64} {
  func.func @_tempnet_resident_kernel(%arg0: i32, %arg1: memref<64x256xbf16, #tpu.memory_space<vmem>>, %arg2: memref<256x128xbf16, #tpu.memory_space<vmem>>, %arg3: memref<128x128xbf16, #tpu.memory_space<vmem>>, %arg4: memref<1x128xf32, #tpu.memory_space<vmem>>, %arg5: memref<1x128xf32, #tpu.memory_space<vmem>>, %arg6: memref<1x128xf32, #tpu.memory_space<vmem>>, %arg7: memref<2xf32, #tpu.memory_space<smem>>, %arg8: memref<64x1xf32, #tpu.memory_space<vmem>>) attributes {dimension_semantics = [#tpu.dimension_semantics<parallel>], iteration_bounds = array<i64: 1>, scalar_prefetch = 0 : i64, scratch_operands = 0 : i64, tpu.core_type = #tpu.core_type<tc>, window_params = [{transform_indices = @transform_0, window_bounds = array<i64: 64, 256>}, {pipeline_mode = #tpu.pipeline_mode<synchronous>, transform_indices = @transform_1, window_bounds = array<i64: 256, 128>}, {pipeline_mode = #tpu.pipeline_mode<synchronous>, transform_indices = @transform_2, window_bounds = array<i64: 128, 128>}, {pipeline_mode = #tpu.pipeline_mode<synchronous>, transform_indices = @transform_3, window_bounds = array<i64: 1, 128>}, {pipeline_mode = #tpu.pipeline_mode<synchronous>, transform_indices = @transform_4, window_bounds = array<i64: 1, 128>}, {pipeline_mode = #tpu.pipeline_mode<synchronous>, transform_indices = @transform_5, window_bounds = array<i64: 1, 128>}, {transform_indices = @transform_6, window_bounds = array<i64: 2>}, {transform_indices = @transform_7, window_bounds = array<i64: 64, 1>}]} {
    %c0 = arith.constant 0 : index
    %c0_0 = arith.constant 0 : index
    %0 = vector.load %arg1[%c0, %c0_0] : memref<64x256xbf16, #tpu.memory_space<vmem>>, vector<64x256xbf16>
    %1 = arith.extf %0 : vector<64x256xbf16> to vector<64x256xf32>
    %2 = arith.mulf %1, %1 : vector<64x256xf32>
    %cst = arith.constant dense<0.000000e+00> : vector<64xf32>
    %3 = vector.multi_reduction <add>, %2, %cst [1] : vector<64x256xf32> to vector<64xf32>
    %4 = vector.shape_cast %3 : vector<64xf32> to vector<64x1xf32>
    %c0_1 = arith.constant 0 : index
    %c0_2 = arith.constant 0 : index
    %5 = vector.load %arg2[%c0_1, %c0_2] : memref<256x128xbf16, #tpu.memory_space<vmem>>, vector<256x128xbf16>
    %cst_3 = arith.constant dense<0.000000e+00> : vector<64x128xf32>
    %6 = tpu.matmul %0, %5, %cst_3 {dimension_numbers = #tpu.dot_dimension_numbers<[1], [0], [0], [1], [0, 0, 1, 1], [], []>} : vector<64x256xbf16>, vector<256x128xbf16>, vector<64x128xf32> -> vector<64x128xf32>
    %cst_4 = arith.constant 1.000000e-24 : f32
    %7 = vector.broadcast %cst_4 : f32 to vector<64x1xf32>
    %8 = arith.maximumf %4, %7 : vector<64x1xf32>
    %9 = math.rsqrt %8 : vector<64x1xf32>
    %10 = vector.broadcast %9 : vector<64x1xf32> to vector<64x128xf32>
    %11 = arith.mulf %6, %10 : vector<64x128xf32>
    %c0_5 = arith.constant 0 : index
    %c0_6 = arith.constant 0 : index
    %12 = vector.load %arg4[%c0_5, %c0_6] : memref<1x128xf32, #tpu.memory_space<vmem>>, vector<1x128xf32>
    %13 = vector.broadcast %12 : vector<1x128xf32> to vector<64x128xf32>
    %14 = arith.addf %11, %13 : vector<64x128xf32>
    %15 = arith.negf %14 : vector<64x128xf32>
    %16 = math.exp %15 : vector<64x128xf32>
    %cst_7 = arith.constant 1.000000e+00 : f32
    %17 = vector.broadcast %cst_7 : f32 to vector<64x128xf32>
    %18 = arith.addf %17, %16 : vector<64x128xf32>
    %19 = arith.divf %17, %18 : vector<64x128xf32>
    %20 = arith.truncf %19 : vector<64x128xf32> to vector<64x128xbf16>
    %c0_8 = arith.constant 0 : index
    %c0_9 = arith.constant 0 : index
    %21 = vector.load %arg3[%c0_8, %c0_9] : memref<128x128xbf16, #tpu.memory_space<vmem>>, vector<128x128xbf16>
    %cst_10 = arith.constant dense<0.000000e+00> : vector<64x128xf32>
    %22 = tpu.matmul %20, %21, %cst_10 {dimension_numbers = #tpu.dot_dimension_numbers<[1], [0], [0], [1], [0, 0, 1, 1], [], []>} : vector<64x128xbf16>, vector<128x128xbf16>, vector<64x128xf32> -> vector<64x128xf32>
    %c0_11 = arith.constant 0 : index
    %c0_12 = arith.constant 0 : index
    %23 = vector.load %arg5[%c0_11, %c0_12] : memref<1x128xf32, #tpu.memory_space<vmem>>, vector<1x128xf32>
    %24 = vector.broadcast %23 : vector<1x128xf32> to vector<64x128xf32>
    %25 = arith.addf %22, %24 : vector<64x128xf32>
    %c0_13 = arith.constant 0 : index
    %26 = memref.load %arg7[%c0_13] : memref<2xf32, #tpu.memory_space<smem>>
    %27 = vector.broadcast %26 : f32 to vector<64x128xf32>
    %28 = arith.mulf %25, %27 : vector<64x128xf32>
    %cst_14 = arith.constant dense<0xFF800000> : vector<64xf32>
    %29 = vector.multi_reduction <maximumf>, %28, %cst_14 [1] : vector<64x128xf32> to vector<64xf32>
    %30 = vector.shape_cast %29 : vector<64xf32> to vector<64x1xf32>
    %31 = vector.broadcast %30 : vector<64x1xf32> to vector<64x128xf32>
    %32 = arith.subf %28, %31 : vector<64x128xf32>
    %33 = math.exp %32 : vector<64x128xf32>
    %cst_15 = arith.constant dense<0.000000e+00> : vector<64xf32>
    %34 = vector.multi_reduction <add>, %33, %cst_15 [1] : vector<64x128xf32> to vector<64xf32>
    %35 = vector.shape_cast %34 : vector<64xf32> to vector<64x1xf32>
    %36 = tpu.reciprocal %35 {approx = true} : vector<64x1xf32> -> vector<64x1xf32>
    %37 = arith.mulf %35, %36 : vector<64x1xf32>
    %cst_16 = arith.constant 2.000000e+00 : f32
    %38 = vector.broadcast %cst_16 : f32 to vector<64x1xf32>
    %39 = arith.subf %38, %37 : vector<64x1xf32>
    %40 = arith.mulf %36, %39 : vector<64x1xf32>
    %41 = vector.broadcast %40 : vector<64x1xf32> to vector<64x128xf32>
    %42 = arith.mulf %33, %41 : vector<64x128xf32>
    %cst_17 = arith.constant 7.812500e-03 : f32
    %43 = vector.broadcast %cst_17 : f32 to vector<64x128xf32>
    %44 = arith.subf %42, %43 : vector<64x128xf32>
    %45 = arith.mulf %44, %25 : vector<64x128xf32>
    %c0_18 = arith.constant 0 : index
    %c0_19 = arith.constant 0 : index
    %46 = vector.load %arg6[%c0_18, %c0_19] : memref<1x128xf32, #tpu.memory_space<vmem>>, vector<1x128xf32>
    %47 = vector.broadcast %46 : vector<1x128xf32> to vector<64x128xf32>
    %48 = arith.mulf %45, %47 : vector<64x128xf32>
    %cst_20 = arith.constant dense<0.000000e+00> : vector<64xf32>
    %49 = vector.multi_reduction <add>, %48, %cst_20 [1] : vector<64x128xf32> to vector<64xf32>
    %50 = vector.shape_cast %49 : vector<64xf32> to vector<64x1xf32>
    %c1 = arith.constant 1 : index
    %51 = memref.load %arg7[%c1] : memref<2xf32, #tpu.memory_space<smem>>
    %52 = vector.broadcast %51 : f32 to vector<64x1xf32>
    %53 = arith.addf %50, %52 : vector<64x1xf32>
    %54 = arith.negf %53 : vector<64x1xf32>
    %55 = math.exp %54 : vector<64x1xf32>
    %cst_21 = arith.constant 1.000000e+00 : f32
    %56 = vector.broadcast %cst_21 : f32 to vector<64x1xf32>
    %57 = arith.addf %56, %55 : vector<64x1xf32>
    %58 = arith.divf %56, %57 : vector<64x1xf32>
    %cst_22 = arith.constant 1.990000e+00 : f32
    %59 = vector.broadcast %cst_22 : f32 to vector<64x1xf32>
    %60 = arith.mulf %59, %58 : vector<64x1xf32>
    %cst_23 = arith.constant 0.00999999977 : f32
    %61 = vector.broadcast %cst_23 : f32 to vector<64x1xf32>
    %62 = arith.addf %60, %61 : vector<64x1xf32>
    %c0_24 = arith.constant 0 : index
    %c0_25 = arith.constant 0 : index
    %63 = vector.load %arg8[%c0_24, %c0_25] : memref<64x1xf32, #tpu.memory_space<vmem>>, vector<64x1xf32>
    tpu.vector_store %arg8[%c0_24, %c0_25], %62 {strides = array<i32>} : memref<64x1xf32, #tpu.memory_space<vmem>>, vector<64x1xf32>,
    return
  }
  func.func @transform_0(%arg0: i32) -> (i32, i32) {
    %c0_i32 = arith.constant 0 : i32
    %c0_i32_0 = arith.constant 0 : i32
    return %arg0, %c0_i32 : i32, i32
  }
  func.func @transform_1(%arg0: i32) -> (i32, i32) {
    %c0_i32 = arith.constant 0 : i32
    %c0_i32_0 = arith.constant 0 : i32
    %c0_i32_1 = arith.constant 0 : i32
    return %c0_i32, %c0_i32_0 : i32, i32
  }
  func.func @transform_2(%arg0: i32) -> (i32, i32) {
    %c0_i32 = arith.constant 0 : i32
    %c0_i32_0 = arith.constant 0 : i32
    %c0_i32_1 = arith.constant 0 : i32
    return %c0_i32, %c0_i32_0 : i32, i32
  }
  func.func @transform_3(%arg0: i32) -> (i32, i32) {
    %c0_i32 = arith.constant 0 : i32
    %c0_i32_0 = arith.constant 0 : i32
    %c0_i32_1 = arith.constant 0 : i32
    return %c0_i32, %c0_i32_0 : i32, i32
  }
  func.func @transform_4(%arg0: i32) -> (i32, i32) {
    %c0_i32 = arith.constant 0 : i32
    %c0_i32_0 = arith.constant 0 : i32
    %c0_i32_1 = arith.constant 0 : i32
    return %c0_i32, %c0_i32_0 : i32, i32
  }
  func.func @transform_5(%arg0: i32) -> (i32, i32) {
    %c0_i32 = arith.constant 0 : i32
    %c0_i32_0 = arith.constant 0 : i32
    %c0_i32_1 = arith.constant 0 : i32
    return %c0_i32, %c0_i32_0 : i32, i32
  }
  func.func @transform_6(%arg0: i32) -> i32 {
    %c0_i32 = arith.constant 0 : i32
    %c0_i32_0 = arith.constant 0 : i32
    return %c0_i32 : i32
  }
  func.func @transform_7(%arg0: i32) -> (i32, i32) {
    %c0_i32 = arith.constant 0 : i32
    %c0_i32_0 = arith.constant 0 : i32
    return %arg0, %c0_i32 : i32, i32
  }
}

</mosaic_0001>

<llo_original>
// kernel: tpu_custom_call.1
$region0: #{tpu_custom_call.1}
  #allocation0 [shape = 'u32[]', space=smem, size = 0x4, offset = 0x4, fixed_abs, tag = 'smem constant byte address 0x4 - core index']
  #allocation1 [shape = 'u32[144,128]{1,0:T(1,128)}', space=vmem, size = 0x12000, scoped, tag = 'internal scratch']
  %s0 = inlined_call_operand.hbm [shape: bf16[60,256], index: 0, kind: input, shape index: {}]
  %s1 = inlined_call_operand.hbm [shape: bf16[256,128], index: 1, kind: input, shape index: {}]
  %s2 = inlined_call_operand.hbm [shape: bf16[128,128], index: 2, kind: input, shape index: {}]
  %s3 = inlined_call_operand.vmem [shape: f32[1,128], index: 3, kind: input, shape index: {}]
  %s4 = inlined_call_operand.vmem [shape: f32[1,128], index: 4, kind: input, shape index: {}]
  %s5 = inlined_call_operand.vmem [shape: f32[1,128], index: 5, kind: input, shape index: {}]
  %s6 = inlined_call_operand.vmem [shape: f32[2], index: 6, kind: input, shape index: {}]
  %s7 = inlined_call_operand.vmem [shape: f32[60,1], index: 7, kind: output, shape index: {}]
  %s8 = sld [smem:[#allocation0]]
  $region54: #{tpu_custom_call.1} parent=0
    _
  %s10 = ssub.s32 1, %s8
  %s11 = scalar_select 0, %s10, %s8
  $region1: #{tpu_custom_call.1} parent=0
    #allocation2 [shape = 'u8[32768]{0}', space=vmem, size = 0x8000, scoped, tag = 'input window, operand 0, single buffered']
    #allocation3 [shape = 's32[1]{0}', space=sflag, size = 0x4, scoped, tag = 'scoped memory for tpu_custom_call.1']
    #allocation4 [shape = 's32[1]{0}', space=sflag, size = 0x4, scoped, tag = 'scoped memory for tpu_custom_call.1']
    #allocation5 [shape = 'u8[65536]{0}', space=vmem, size = 0x10000, scoped, tag = 'input window, operand 1, single buffered']
    #allocation6 [shape = 's32[1]{0}', space=sflag, size = 0x4, scoped, tag = 'scoped memory for tpu_custom_call.1']
    #allocation7 [shape = 'u8[32768]{0}', space=vmem, size = 0x8000, scoped, tag = 'input window, operand 2, single buffered']
    #allocation8 [shape = 'u8[512]{0}', space=smem, size = 0x200, scoped, tag = 'input window, operand 6, single buffered']
    %12 = vsyncpa [#allocation3], 0
    %13 = vsyncpa [#allocation6], 0
    %14 = vsyncpa [#allocation4], 0
    // Predicated region
    $region2: #{tpu_custom_call.1} parent=1 // pred_check
      _
    $region3: #{tpu_custom_call.1} parent=1 // pred_check_branch
      %16 = sbr.rel (0) target = $region5
    $region4: #{tpu_custom_call.1} parent=1 // pred_region
      %s18 = ssub.s32 1024, 1024
      %19 = vsyncadd [#allocation3], %s18
      %s20 = sshll.u32 [#allocation2], 4
      %s21 = int_to_ptr.vmem [resolvable:$true] %s20
      %26 = dma.hbm_to_vmem [thread:$0]  %s0, 1024, %s21, [#allocation3], 128, 128, 8
    $region5: #{tpu_custom_call.1} parent=1 // pred_fallthru
      _
    // Predicated region
    $region6: #{tpu_custom_call.1} parent=1 // pred_check
      _
    $region7: #{tpu_custom_call.1} parent=1 // pred_check_branch
      %28 = sbr.rel (0) target = $region9
    $region8: #{tpu_custom_call.1} parent=1 // pred_region
      %s30 = ssub.s32 2048, 2048
      %31 = vsyncadd [#allocation6], %s30
      %s32 = sshll.u32 [#allocation5], 4
      %s33 = int_to_ptr.vmem [resolvable:$true] %s32
      %38 = dma.hbm_to_vmem [thread:$0]  %s1, 2048, %s33, [#allocation6], 64, 64, 4
    $region9: #{tpu_custom_call.1} parent=1 // pred_fallthru
      _
    // Predicated region
    $region10: #{tpu_custom_call.1} parent=1 // pred_check
      _
    $region11: #{tpu_custom_call.1} parent=1 // pred_check_branch
      %40 = sbr.rel (0) target = $region13
    $region12: #{tpu_custom_call.1} parent=1 // pred_region
      %s42 = ssub.s32 1024, 1024
      %43 = vsyncadd [#allocation6], %s42
      %s44 = sshll.u32 [#allocation7], 4
      %s45 = int_to_ptr.vmem [resolvable:$true] %s44
      %50 = dma.hbm_to_vmem [thread:$0]  %s2, 1024, %s45, [#allocation6], 64, 64, 4
    $region13: #{tpu_custom_call.1} parent=1 // pred_fallthru
      _
    // Predicated region
    $region14: #{tpu_custom_call.1} parent=1 // pred_check
      _
    $region15: #{tpu_custom_call.1} parent=1 // pred_check_branch
      %52 = sbr.rel (0) target = $region17
    $region16: #{tpu_custom_call.1} parent=1 // pred_region
      _
    $region17: #{tpu_custom_call.1} parent=1 // pred_fallthru
      _
    // Predicated region
    $region18: #{tpu_custom_call.1} parent=1 // pred_check
      _
    $region19: #{tpu_custom_call.1} parent=1 // pred_check_branch
      %54 = sbr.rel (0) target = $region21
    $region20: #{tpu_custom_call.1} parent=1 // pred_region
      _
    $region21: #{tpu_custom_call.1} parent=1 // pred_fallthru
      _
    // Predicated region
    $region22: #{tpu_custom_call.1} parent=1 // pred_check
      _
    $region23: #{tpu_custom_call.1} parent=1 // pred_check_branch
      %56 = sbr.rel (0) target = $region25
    $region24: #{tpu_custom_call.1} parent=1 // pred_region
      _
    $region25: #{tpu_custom_call.1} parent=1 // pred_fallthru
      _
    // Predicated region
    $region26: #{tpu_custom_call.1} parent=1 // pred_check
      _
    $region27: #{tpu_custom_call.1} parent=1 // pred_check_branch
      %58 = sbr.rel (0) target = $region29
    $region28: #{tpu_custom_call.1} parent=1 // pred_region
      %s60 = ssub.s32 16, 16
      %61 = vsyncadd [#allocation4], %s60
      %s63 = sshll.u32 %s6, 4
      %s64 = int_to_ptr.vmem [resolvable:$true] %s63
      %66 = dma.vmem_to_smem %s64, 16, [#allocation8], [#allocation4]
    $region29: #{tpu_custom_call.1} parent=1 // pred_fallthru
      _
    // Predicated region
    $region30: #{tpu_custom_call.1} parent=1 // pred_check
      _
    $region31: #{tpu_custom_call.1} parent=1 // pred_check_branch
      %68 = sbr.rel (0) target = $region33
    $region32: #{tpu_custom_call.1} parent=1 // pred_region
      %69 = dma.done [#allocation3], 1024
    $region33: #{tpu_custom_call.1} parent=1 // pred_fallthru
      _
    // Predicated region
    $region34: #{tpu_custom_call.1} parent=1 // pred_check
      _
    $region35: #{tpu_custom_call.1} parent=1 // pred_check_branch
      %71 = sbr.rel (0) target = $region37
    $region36: #{tpu_custom_call.1} parent=1 // pred_region
      %72 = dma.done [#allocation6], 2048
    $region37: #{tpu_custom_call.1} parent=1 // pred_fallthru
      _
    // Predicated region
    $region38: #{tpu_custom_call.1} parent=1 // pred_check
      _
    $region39: #{tpu_custom_call.1} parent=1 // pred_check_branch
      %74 = sbr.rel (0) target = $region41
    $region40: #{tpu_custom_call.1} parent=1 // pred_region
      %75 = dma.done [#allocation6], 1024
    $region41: #{tpu_custom_call.1} parent=1 // pred_fallthru
      _
    // Predicated region
    $region42: #{tpu_custom_call.1} parent=1 // pred_check
      _
    $region43: #{tpu_custom_call.1} parent=1 // pred_check_branch
      %77 = sbr.rel (0) target = $region45
    $region44: #{tpu_custom_call.1} parent=1 // pred_region
      %78 = dma.done [#allocation4], 16
    $region45: #{tpu_custom_call.1} parent=1 // pred_fallthru
      _
    %79 = sfence
    %v81 = vld [vmem:[#allocation2] sm:$0xff]
    %v82 = vld [vmem:[#allocation2 + $0x8] sm:$0xff]
    %v83 = vld [vmem:[#allocation2 + $0x10] sm:$0xff]
    %v84 = vld [vmem:[#allocation2 + $0x18] sm:$0xff]
    %v85 = vld [vmem:[#allocation2 + $0x20] sm:$0xff]
    %v86 = vld [vmem:[#allocation2 + $0x28] sm:$0xff]
    %v87 = vld [vmem:[#allocation2 + $0x30] sm:$0xff]
    %v88 = vld [vmem:[#allocation2 + $0x38] sm:$0xff]
    %v89 = vunpack.c.l.bf16 %v81
    %v90 = vunpack.c.h.bf16 %v81
    %v91 = vunpack.c.l.bf16 %v82
    %v92 = vunpack.c.h.bf16 %v82
    %v93 = vunpack.c.l.bf16 %v83
    %v94 = vunpack.c.h.bf16 %v83
    %v95 = vunpack.c.l.bf16 %v84
    %v96 = vunpack.c.h.bf16 %v84
    %v97 = vunpack.c.l.bf16 %v85
    %v98 = vunpack.c.h.bf16 %v85
    %v99 = vunpack.c.l.bf16 %v86
    %v100 = vunpack.c.h.bf16 %v86
    %v101 = vunpack.c.l.bf16 %v87
    %v102 = vunpack.c.h.bf16 %v87
    %v103 = vunpack.c.l.bf16 %v88
    %v104 = vunpack.c.h.bf16 %v88
    %v105 = vmul.f32 %v89, %v89
    %v106 = vmul.f32 %v90, %v90
    %v107 = vmul.f32 %v91, %v91
    %v108 = vmul.f32 %v92, %v92
    %v109 = vmul.f32 %v93, %v93
    %v110 = vmul.f32 %v94, %v94
    %v111 = vmul.f32 %v95, %v95
    %v112 = vmul.f32 %v96, %v96
    %v113 = vmul.f32 %v97, %v97
    %v114 = vmul.f32 %v98, %v98
    %v115 = vmul.f32 %v99, %v99
    %v116 = vmul.f32 %v100, %v100
    %v117 = vmul.f32 %v101, %v101
    %v118 = vmul.f32 %v102, %v102
    %v119 = vmul.f32 %v103, %v103
    %v120 = vmul.f32 %v104, %v104
    %v121 = vadd.f32 %v105, %v106
    %122 = vadd.xlane.f32.xlu0 %v121
    %v123 = vpop.xlane.xlu0 %122
    %v124 = vadd.f32 %v107, %v108
    %125 = vadd.xlane.f32.xlu0 %v124
    %v126 = vpop.xlane.xlu0 %125
    %v127 = vadd.f32 %v109, %v110
    %128 = vadd.xlane.f32.xlu0 %v127
    %v129 = vpop.xlane.xlu0 %128
    %v130 = vadd.f32 %v111, %v112
    %131 = vadd.xlane.f32.xlu0 %v130
    %v132 = vpop.xlane.xlu0 %131
    %v133 = vadd.f32 %v113, %v114
    %134 = vadd.xlane.f32.xlu0 %v133
    %v135 = vpop.xlane.xlu0 %134
    %v136 = vadd.f32 %v115, %v116
    %137 = vadd.xlane.f32.xlu0 %v136
    %v138 = vpop.xlane.xlu0 %137
    %v139 = vadd.f32 %v117, %v118
    %140 = vadd.xlane.f32.xlu0 %v139
    %v141 = vpop.xlane.xlu0 %140
    %v142 = vadd.f32 %v119, %v120
    %143 = vadd.xlane.f32.xlu0 %v142
    %v144 = vpop.xlane.xlu0 %143
    %v145 = vld [vmem:[#allocation5] sm:$0xf]
    %v146 = vld [vmem:[#allocation5 + $0x4] sm:$0xf]
    %v147 = vld [vmem:[#allocation5 + $0x8] sm:$0xf]
    %v148 = vld [vmem:[#allocation5 + $0xc] sm:$0xf]
    %v149 = vld [vmem:[#allocation5 + $0x10] sm:$0xf]
    %v150 = vld [vmem:[#allocation5 + $0x14] sm:$0xf]
    %v151 = vld [vmem:[#allocation5 + $0x18] sm:$0xf]
    %v152 = vld [vmem:[#allocation5 + $0x1c] sm:$0xf]
    %v153 = vld [vmem:[#allocation5 + $0x20] sm:$0xf]
    %v154 = vld [vmem:[#allocation5 + $0x24] sm:$0xf]
    %v155 = vld [vmem:[#allocation5 + $0x28] sm:$0xf]
    %v156 = vld [vmem:[#allocation5 + $0x2c] sm:$0xf]
    %v157 = vld [vmem:[#allocation5 + $0x30] sm:$0xf]
    %v158 = vld [vmem:[#allocation5 + $0x34] sm:$0xf]
    %v159 = vld [vmem:[#allocation5 + $0x38] sm:$0xf]
    %v160 = vld [vmem:[#allocation5 + $0x3c] sm:$0xf]
    %v161 = vld [vmem:[#allocation5 + $0x40] sm:$0xf]
    %v162 = vld [vmem:[#allocation5 + $0x44] sm:$0xf]
    %v163 = vld [vmem:[#allocation5 + $0x48] sm:$0xf]
    %v164 = vld [vmem:[#allocation5 + $0x4c] sm:$0xf]
    %v165 = vld [vmem:[#allocation5 + $0x50] sm:$0xf]
    %v166 = vld [vmem:[#allocation5 + $0x54] sm:$0xf]
    %v167 = vld [vmem:[#allocation5 + $0x58] sm:$0xf]
    %v168 = vld [vmem:[#allocation5 + $0x5c] sm:$0xf]
    %v169 = vld [vmem:[#allocation5 + $0x60] sm:$0xf]
    %v170 = vld [vmem:[#allocation5 + $0x64] sm:$0xf]
    %v171 = vld [vmem:[#allocation5 + $0x68] sm:$0xf]
    %v172 = vld [vmem:[#allocation5 + $0x6c] sm:$0xf]
    %v173 = vld [vmem:[#allocation5 + $0x70] sm:$0xf]
    %v174 = vld [vmem:[#allocation5 + $0x74] sm:$0xf]
    %v175 = vld [vmem:[#allocation5 + $0x78] sm:$0xf]
    %v176 = vld [vmem:[#allocation5 + $0x7c] sm:$0xf]
    %v185 = vunpack.c.l.b16 %v81
    %v186 = vunpack.c.h.b16 %v81
    %v187 = vunpack.c.l.b16 %v82
    %v188 = vunpack.c.h.b16 %v82
    %v189 = vunpack.c.l.b16 %v83
    %v190 = vunpack.c.h.b16 %v83
    %v191 = vunpack.c.l.b16 %v84
    %v192 = vunpack.c.h.b16 %v84
    %v193 = vunpack.c.l.b16 %v85
    %v194 = vunpack.c.h.b16 %v85
    %v195 = vunpack.c.l.b16 %v86
    %v196 = vunpack.c.h.b16 %v86
    %v197 = vunpack.c.l.b16 %v87
    %v198 = vunpack.c.h.b16 %v87
    %v199 = vunpack.c.l.b16 %v88
    %v200 = vunpack.c.h.b16 %v88
    %v201 = vpack.c.b16 %v187, %v185
    %v202 = vpack.c.b16 %v188, %v186
    %v203 = vpack.c.b16 %v191, %v189
    %v204 = vpack.c.b16 %v192, %v190
    %v205 = vpack.c.b16 %v195, %v193
    %v206 = vpack.c.b16 %v196, %v194
    %v207 = vpack.c.b16 %v199, %v197
    %v208 = vpack.c.b16 %v200, %v198
    %v249 = vunpack.c.l.b16 %v145
    %v250 = vunpack.c.l.b16 %v146
    %v251 = vunpack.c.l.b16 %v147
    %v252 = vunpack.c.l.b16 %v148
    %v253 = vunpack.c.l.b16 %v149
    %v254 = vunpack.c.l.b16 %v150
    %v255 = vunpack.c.l.b16 %v151
    %v256 = vunpack.c.l.b16 %v152
    %v257 = vunpack.c.l.b16 %v153
    %v258 = vunpack.c.l.b16 %v154
    %v259 = vunpack.c.l.b16 %v155
    %v260 = vunpack.c.l.b16 %v156
    %v261 = vunpack.c.l.b16 %v157
    %v262 = vunpack.c.l.b16 %v158
    %v263 = vunpack.c.l.b16 %v159
    %v264 = vunpack.c.l.b16 %v160
    %v265 = vunpack.c.l.b16 %v161
    %v266 = vunpack.c.l.b16 %v162
    %v267 = vunpack.c.l.b16 %v163
    %v268 = vunpack.c.l.b16 %v164
    %v269 = vunpack.c.l.b16 %v165
    %v270 = vunpack.c.l.b16 %v166
    %v271 = vunpack.c.l.b16 %v167
    %v272 = vunpack.c.l.b16 %v168
    %v273 = vunpack.c.l.b16 %v169
    %v274 = vunpack.c.l.b16 %v170
    %v275 = vunpack.c.l.b16 %v171
    %v276 = vunpack.c.l.b16 %v172
    %v277 = vunpack.c.l.b16 %v173
    %v278 = vunpack.c.l.b16 %v174
    %v279 = vunpack.c.l.b16 %v175
    %v280 = vunpack.c.l.b16 %v176
    %v281 = vpack.c.b16 %v250, %v249
    %v282 = vpack.c.b16 %v252, %v251
    %v283 = vpack.c.b16 %v254, %v253
    %v284 = vpack.c.b16 %v256, %v255
    %v285 = vpack.c.b16 %v258, %v257
    %v286 = vpack.c.b16 %v260, %v259
    %v287 = vpack.c.b16 %v262, %v261
    %v288 = vpack.c.b16 %v264, %v263
    %v289 = vpack.c.b16 %v266, %v265
    %v290 = vpack.c.b16 %v268, %v267
    %v291 = vpack.c.b16 %v270, %v269
    %v292 = vpack.c.b16 %v272, %v271
    %v293 = vpack.c.b16 %v274, %v273
    %v294 = vpack.c.b16 %v276, %v275
    %v295 = vpack.c.b16 %v278, %v277
    %v296 = vpack.c.b16 %v280, %v279
    %313 = vmatprep.subr.bf16.mxu0 0
    %314 = vmatpush1.bf16.msra.mxu0 %v281
    %315 = vmatprep.subr.bf16.mxu0 0
    %316 = vmatpush1.bf16.msra.mxu0 %v282
    %317 = vmatprep.subr.bf16.mxu0 0
    %318 = vmatpush1.bf16.msra.mxu0 %v283
    %319 = vmatprep.subr.bf16.mxu0 0
    %320 = vmatpush1.bf16.msra.mxu0 %v284
    %321 = vmatprep.subr.bf16.mxu0 0
    %322 = vmatpush1.bf16.msra.mxu0 %v285
    %323 = vmatprep.subr.bf16.mxu0 0
    %324 = vmatpush1.bf16.msra.mxu0 %v286
    %325 = vmatprep.subr.bf16.mxu0 0
    %326 = vmatpush1.bf16.msra.mxu0 %v287
    %327 = vmatprep.subr.bf16.mxu0 0
    %328 = vmatpush1.bf16.msra.mxu0 %v288
    %329 = vmatprep.subr.bf16.mxu0 0
    %330 = vmatpush1.bf16.msra.mxu0 %v289
    %331 = vmatprep.subr.bf16.mxu0 0
    %332 = vmatpush1.bf16.msra.mxu0 %v290
    %333 = vmatprep.subr.bf16.mxu0 0
    %334 = vmatpush1.bf16.msra.mxu0 %v291
    %335 = vmatprep.subr.bf16.mxu0 0
    %336 = vmatpush1.bf16.msra.mxu0 %v292
    %337 = vmatprep.subr.bf16.mxu0 0
    %338 = vmatpush1.bf16.msra.mxu0 %v293
    %339 = vmatprep.subr.bf16.mxu0 0
    %340 = vmatpush1.bf16.msra.mxu0 %v294
    %341 = vmatprep.subr.bf16.mxu0 0
    %342 = vmatpush1.bf16.msra.mxu0 %v295
    %343 = vmatprep.subr.bf16.mxu0 0
    %344 = vmatpush1.bf16.msra.mxu0 %v296
    %345 = vmatprep.mubr.bf16.mxu0 %v202
    %346 = vmatmul.mubr.bf16.gmra.mrb[0].mxu0 %v201
    %v347 = vpop.f32.mrb[0].mxu0
    %v348 = vadd.f32 0.0, %v347
    %v349 = vpop.f32.mrb[0].mxu0
    %v350 = vpop.f32.mrb[0].mxu0
    %v351 = vadd.f32 0.0, %v350
    %v352 = vpop.f32.mrb[0].mxu0
    %353 = vmatprep.mubr.bf16.mxu0 %v204
    %354 = vmatmul.mubr.bf16.gmra.mrb[0].mxu0 %v203
    %v355 = vpop.f32.mrb[0].mxu0
    %v356 = vadd.f32 0.0, %v355
    %v357 = vpop.f32.mrb[0].mxu0
    %v358 = vpop.f32.mrb[0].mxu0
    %v359 = vadd.f32 0.0, %v358
    %v360 = vpop.f32.mrb[0].mxu0
    %361 = vmatprep.mubr.bf16.mxu0 %v206
    %362 = vmatmul.mubr.bf16.gmra.mrb[0].mxu0 %v205
    %v363 = vpop.f32.mrb[0].mxu0
    %v364 = vadd.f32 0.0, %v363
    %v365 = vpop.f32.mrb[0].mxu0
    %v366 = vpop.f32.mrb[0].mxu0
    %v367 = vadd.f32 0.0, %v366
    %v368 = vpop.f32.mrb[0].mxu0
    %369 = vmatprep.mubr.bf16.mxu0 %v208
    %370 = vmatmul.mubr.bf16.gmra.mrb[0].mxu0 %v207
    %v371 = vpop.f32.mrb[0].mxu0
    %v372 = vadd.f32 0.0, %v371
    %v373 = vpop.f32.mrb[0].mxu0
    %v374 = vpop.f32.mrb[0].mxu0
    %v375 = vadd.f32 0.0, %v374
    %v376 = vpop.f32.mrb[0].mxu0
    %377 = vdwg.mxu0
    %v378 = vmax.f32 %v123, 1e-24
    %v379 = vmax.f32 %v126, 1e-24
    %v380 = vmax.f32 %v129, 1e-24
    %v381 = vmax.f32 %v132, 1e-24
    %v382 = vmax.f32 %v135, 1e-24
    %v383 = vmax.f32 %v138, 1e-24
    %v384 = vmax.f32 %v141, 1e-24
    %v385 = vmax.f32 %v144, 1e-24
    %v386 = vrsqrt.pop %v378
    %v387 = vrsqrt.pop %v379
    %v388 = vrsqrt.pop %v380
    %v389 = vrsqrt.pop %v381
    %v390 = vrsqrt.pop %v382
    %v391 = vrsqrt.pop %v383
    %v392 = vrsqrt.pop %v384
    %v393 = vrsqrt.pop %v385
    %v394 = vmul.f32 %v348, %v386
    %v395 = vmul.f32 %v351, %v387
    %v396 = vmul.f32 %v356, %v388
    %v397 = vmul.f32 %v359, %v389
    %v398 = vmul.f32 %v364, %v390
    %v399 = vmul.f32 %v367, %v391
    %v400 = vmul.f32 %v372, %v392
    %v401 = vmul.f32 %v375, %v393
    %v402 = vld [vmem:[%s3] sm:$0x1]
    %v404 = vlaneseq
    %v405 = vshrl.u32 %v404, 7
    %v406 = vsub.s32 0, %v405
    %v407 = vrot.slane %v402, %v406
    %v409 = vadd.f32 %v394, %v407
    %v410 = vadd.f32 %v395, %v407
    %v411 = vadd.f32 %v396, %v407
    %v412 = vadd.f32 %v397, %v407
    %v413 = vadd.f32 %v398, %v407
    %v414 = vadd.f32 %v399, %v407
    %v415 = vadd.f32 %v400, %v407
    %v416 = vadd.f32 %v401, %v407
    %v417 = vxor.u32 %v409, 2147483648
    %v418 = vxor.u32 %v410, 2147483648
    %v419 = vxor.u32 %v411, 2147483648
    %v420 = vxor.u32 %v412, 2147483648
    %v421 = vxor.u32 %v413, 2147483648
    %v422 = vxor.u32 %v414, 2147483648
    %v423 = vxor.u32 %v415, 2147483648
    %v424 = vxor.u32 %v416, 2147483648
    %v425 = vmul.f32 %v417, 1.442695
    %v426 = vpow.pop %v425
    %v427 = vmul.f32 %v418, 1.442695
    %v428 = vpow.pop %v427
    %v429 = vmul.f32 %v419, 1.442695
    %v430 = vpow.pop %v429
    %v431 = vmul.f32 %v420, 1.442695
    %v432 = vpow.pop %v431
    %v433 = vmul.f32 %v421, 1.442695
    %v434 = vpow.pop %v433
    %v435 = vmul.f32 %v422, 1.442695
    %v436 = vpow.pop %v435
    %v437 = vmul.f32 %v423, 1.442695
    %v438 = vpow.pop %v437
    %v439 = vmul.f32 %v424, 1.442695
    %v440 = vpow.pop %v439
    %v441 = vadd.f32 %v426, 1.0
    %v442 = vadd.f32 %v428, 1.0
    %v443 = vadd.f32 %v430, 1.0
    %v444 = vadd.f32 %v432, 1.0
    %v445 = vadd.f32 %v434, 1.0
    %v446 = vadd.f32 %v436, 1.0
    %v447 = vadd.f32 %v438, 1.0
    %v448 = vadd.f32 %v440, 1.0
    %v449 = vrcp.pop %v441
    %v450 = vmul.f32 1.0, %v449
    %v451 = vrcp.pop %v442
    %v452 = vmul.f32 1.0, %v451
    %v453 = vrcp.pop %v443
    %v454 = vmul.f32 1.0, %v453
    %v455 = vrcp.pop %v444
    %v456 = vmul.f32 1.0, %v455
    %v457 = vrcp.pop %v445
    %v458 = vmul.f32 1.0, %v457
    %v459 = vrcp.pop %v446
    %v460 = vmul.f32 1.0, %v459
    %v461 = vrcp.pop %v447
    %v462 = vmul.f32 1.0, %v461
    %v463 = vrcp.pop %v448
    %v464 = vmul.f32 1.0, %v463
    %v465 = vpack.c.bf16 %v452, %v450
    %v466 = vpack.c.bf16 %v456, %v454
    %v467 = vpack.c.bf16 %v460, %v458
    %v468 = vpack.c.bf16 %v464, %v462
    %v469 = vld [vmem:[#allocation7] sm:$0xf]
    %v470 = vld [vmem:[#allocation7 + $0x4] sm:$0xf]
    %v471 = vld [vmem:[#allocation7 + $0x8] sm:$0xf]
    %v472 = vld [vmem:[#allocation7 + $0xc] sm:$0xf]
    %v473 = vld [vmem:[#allocation7 + $0x10] sm:$0xf]
    %v474 = vld [vmem:[#allocation7 + $0x14] sm:$0xf]
    %v475 = vld [vmem:[#allocation7 + $0x18] sm:$0xf]
    %v476 = vld [vmem:[#allocation7 + $0x1c] sm:$0xf]
    %v477 = vld [vmem:[#allocation7 + $0x20] sm:$0xf]
    %v478 = vld [vmem:[#allocation7 + $0x24] sm:$0xf]
    %v479 = vld [vmem:[#allocation7 + $0x28] sm:$0xf]
    %v480 = vld [vmem:[#allocation7 + $0x2c] sm:$0xf]
    %v481 = vld [vmem:[#allocation7 + $0x30] sm:$0xf]
    %v482 = vld [vmem:[#allocation7 + $0x34] sm:$0xf]
    %v483 = vld [vmem:[#allocation7 + $0x38] sm:$0xf]
    %v484 = vld [vmem:[#allocation7 + $0x3c] sm:$0xf]
    %v485 = vld [vmem:[%s4] sm:$0x1]
    %v487 = vlaneseq
    %v488 = vshrl.u32 %v487, 7
    %v489 = vsub.s32 0, %v488
    %v490 = vrot.slane %v485, %v489
    %v508 = vunpack.c.l.b16 %v469
    %v509 = vunpack.c.l.b16 %v470
    %v510 = vunpack.c.l.b16 %v471
    %v511 = vunpack.c.l.b16 %v472
    %v512 = vunpack.c.l.b16 %v473
    %v513 = vunpack.c.l.b16 %v474
    %v514 = vunpack.c.l.b16 %v475
    %v515 = vunpack.c.l.b16 %v476
    %v516 = vunpack.c.l.b16 %v477
    %v517 = vunpack.c.l.b16 %v478
    %v518 = vunpack.c.l.b16 %v479
    %v519 = vunpack.c.l.b16 %v480
    %v520 = vunpack.c.l.b16 %v481
    %v521 = vunpack.c.l.b16 %v482
    %v522 = vunpack.c.l.b16 %v483
    %v523 = vunpack.c.l.b16 %v484
    %v524 = vpack.c.b16 %v509, %v508
    %v525 = vpack.c.b16 %v511, %v510
    %v526 = vpack.c.b16 %v513, %v512
    %v527 = vpack.c.b16 %v515, %v514
    %v528 = vpack.c.b16 %v517, %v516
    %v529 = vpack.c.b16 %v519, %v518
    %v530 = vpack.c.b16 %v521, %v520
    %v531 = vpack.c.b16 %v523, %v522
    %540 = vmatprep.subr.bf16.mxu0 0
    %541 = vmatpush1.bf16.msra.mxu0 %v524
    %542 = vmatprep.subr.bf16.mxu0 0
    %543 = vmatpush1.bf16.msra.mxu0 %v525
    %544 = vmatprep.subr.bf16.mxu0 0
    %545 = vmatpush1.bf16.msra.mxu0 %v526
    %546 = vmatprep.subr.bf16.mxu0 0
    %547 = vmatpush1.bf16.msra.mxu0 %v527
    %548 = vmatprep.subr.bf16.mxu0 0
    %549 = vmatpush1.bf16.msra.mxu0 %v528
    %550 = vmatprep.subr.bf16.mxu0 0
    %551 = vmatpush1.bf16.msra.mxu0 %v529
    %552 = vmatprep.subr.bf16.mxu0 0
    %553 = vmatpush1.bf16.msra.mxu0 %v530
    %554 = vmatprep.subr.bf16.mxu0 0
    %555 = vmatpush1.bf16.msra.mxu0 %v531
    %556 = vmatprep.subr.bf16.mxu0 0
    %557 = vmatpush1.bf16.msra.mxu0 0
    %558 = vmatprep.subr.bf16.mxu0 0
    %559 = vmatpush1.bf16.msra.mxu0 0
    %560 = vmatprep.subr.bf16.mxu0 0
    %561 = vmatpush1.bf16.msra.mxu0 0
    %562 = vmatprep.subr.bf16.mxu0 0
    %563 = vmatpush1.bf16.msra.mxu0 0
    %564 = vmatprep.subr.bf16.mxu0 0
    %565 = vmatpush1.bf16.msra.mxu0 0
    %566 = vmatprep.subr.bf16.mxu0 0
    %567 = vmatpush1.bf16.msra.mxu0 0
    %568 = vmatprep.subr.bf16.mxu0 0
    %569 = vmatpush1.bf16.msra.mxu0 0
    %570 = vmatprep.subr.bf16.mxu0 0
    %571 = vmatpush1.bf16.msra.mxu0 0
    %572 = vmatprep.mubr.bf16.mxu0 0
    %573 = vmatmul.mubr.bf16.gmra.mrb[0].mxu0 %v465
    %v574 = vpop.f32.mrb[0].mxu0
    %v575 = vadd.f32 %v490, %v574
    %v576 = vpop.f32.mrb[0].mxu0
    %v577 = vpop.f32.mrb[0].mxu0
    %v578 = vadd.f32 %v490, %v577
    %v579 = vpop.f32.mrb[0].mxu0
    %580 = vmatprep.mubr.bf16.mxu0 0
    %581 = vmatmul.mubr.bf16.gmra.mrb[0].mxu0 %v466
    %v582 = vpop.f32.mrb[0].mxu0
    %v583 = vadd.f32 %v490, %v582
    %v584 = vpop.f32.mrb[0].mxu0
    %v585 = vpop.f32.mrb[0].mxu0
    %v586 = vadd.f32 %v490, %v585
    %v587 = vpop.f32.mrb[0].mxu0
    %588 = vmatprep.mubr.bf16.mxu0 0
    %589 = vmatmul.mubr.bf16.gmra.mrb[0].mxu0 %v467
    %v590 = vpop.f32.mrb[0].mxu0
    %v591 = vadd.f32 %v490, %v590
    %v592 = vpop.f32.mrb[0].mxu0
    %v593 = vpop.f32.mrb[0].mxu0
    %v594 = vadd.f32 %v490, %v593
    %v595 = vpop.f32.mrb[0].mxu0
    %596 = vmatprep.mubr.bf16.mxu0 0
    %597 = vmatmul.mubr.bf16.gmra.mrb[0].mxu0 %v468
    %v598 = vpop.f32.mrb[0].mxu0
    %v599 = vadd.f32 %v490, %v598
    %v600 = vpop.f32.mrb[0].mxu0
    %v601 = vpop.f32.mrb[0].mxu0
    %v602 = vadd.f32 %v490, %v601
    %v603 = vpop.f32.mrb[0].mxu0
    %604 = vdwg.mxu0
    %s605 = sld [smem:[#allocation8]]
    %v606 = vstv %s605
    %v607 = vmul.f32 %v575, %v606
    %v608 = vmul.f32 %v578, %v606
    %v609 = vmul.f32 %v583, %v606
    %v610 = vmul.f32 %v586, %v606
    %v611 = vmul.f32 %v591, %v606
    %v612 = vmul.f32 %v594, %v606
    %v613 = vmul.f32 %v599, %v606
    %v614 = vmul.f32 %v602, %v606
    %615 = vmax.xlane.f32.xlu0 %v607
    %v616 = vpop.xlane.xlu0 %615
    %617 = vmax.xlane.f32.xlu0 %v608
    %v618 = vpop.xlane.xlu0 %617
    %619 = vmax.xlane.f32.xlu0 %v609
    %v620 = vpop.xlane.xlu0 %619
    %621 = vmax.xlane.f32.xlu0 %v610
    %v622 = vpop.xlane.xlu0 %621
    %623 = vmax.xlane.f32.xlu0 %v611
    %v624 = vpop.xlane.xlu0 %623
    %625 = vmax.xlane.f32.xlu0 %v612
    %v626 = vpop.xlane.xlu0 %625
    %627 = vmax.xlane.f32.xlu0 %v613
    %v628 = vpop.xlane.xlu0 %627
    %629 = vmax.xlane.f32.xlu0 %v614
    %v630 = vpop.xlane.xlu0 %629
    %v631 = vsub.f32 %v607, %v616
    %v632 = vsub.f32 %v608, %v618
    %v633 = vsub.f32 %v609, %v620
    %v634 = vsub.f32 %v610, %v622
    %v635 = vsub.f32 %v611, %v624
    %v636 = vsub.f32 %v612, %v626
    %v637 = vsub.f32 %v613, %v628
    %v638 = vsub.f32 %v614, %v630
    %v639 = vmul.f32 %v631, 1.442695
    %v640 = vpow.pop %v639
    %v641 = vmul.f32 %v632, 1.442695
    %v642 = vpow.pop %v641
    %v643 = vmul.f32 %v633, 1.442695
    %v644 = vpow.pop %v643
    %v645 = vmul.f32 %v634, 1.442695
    %v646 = vpow.pop %v645
    %v647 = vmul.f32 %v635, 1.442695
    %v648 = vpow.pop %v647
    %v649 = vmul.f32 %v636, 1.442695
    %v650 = vpow.pop %v649
    %v651 = vmul.f32 %v637, 1.442695
    %v652 = vpow.pop %v651
    %v653 = vmul.f32 %v638, 1.442695
    %v654 = vpow.pop %v653
    %655 = vadd.xlane.f32.xlu0 %v640
    %v656 = vpop.xlane.xlu0 %655
    %657 = vadd.xlane.f32.xlu0 %v642
    %v658 = vpop.xlane.xlu0 %657
    %659 = vadd.xlane.f32.xlu0 %v644
    %v660 = vpop.xlane.xlu0 %659
    %661 = vadd.xlane.f32.xlu0 %v646
    %v662 = vpop.xlane.xlu0 %661
    %663 = vadd.xlane.f32.xlu0 %v648
    %v664 = vpop.xlane.xlu0 %663
    %665 = vadd.xlane.f32.xlu0 %v650
    %v666 = vpop.xlane.xlu0 %665
    %667 = vadd.xlane.f32.xlu0 %v652
    %v668 = vpop.xlane.xlu0 %667
    %669 = vadd.xlane.f32.xlu0 %v654
    %v670 = vpop.xlane.xlu0 %669
    %v671 = vrcp.pop %v656
    %v672 = vrcp.pop %v658
    %v673 = vrcp.pop %v660
    %v674 = vrcp.pop %v662
    %v675 = vrcp.pop %v664
    %v676 = vrcp.pop %v666
    %v677 = vrcp.pop %v668
    %v678 = vrcp.pop %v670
    %v679 = vmul.f32 %v656, %v671
    %v680 = vmul.f32 %v658, %v672
    %v681 = vmul.f32 %v660, %v673
    %v682 = vmul.f32 %v662, %v674
    %v683 = vmul.f32 %v664, %v675
    %v684 = vmul.f32 %v666, %v676
    %v685 = vmul.f32 %v668, %v677
    %v686 = vmul.f32 %v670, %v678
    %v687 = vsub.f32 2.0, %v679
    %v688 = vsub.f32 2.0, %v680
    %v689 = vsub.f32 2.0, %v681
    %v690 = vsub.f32 2.0, %v682
    %v691 = vsub.f32 2.0, %v683
    %v692 = vsub.f32 2.0, %v684
    %v693 = vsub.f32 2.0, %v685
    %v694 = vsub.f32 2.0, %v686
    %v695 = vmul.f32 %v671, %v687
    %v696 = vmul.f32 %v672, %v688
    %v697 = vmul.f32 %v673, %v689
    %v698 = vmul.f32 %v674, %v690
    %v699 = vmul.f32 %v675, %v691
    %v700 = vmul.f32 %v676, %v692
    %v701 = vmul.f32 %v677, %v693
    %v702 = vmul.f32 %v678, %v694
    %v703 = vmul.f32 %v640, %v695
    %v704 = vmul.f32 %v642, %v696
    %v705 = vmul.f32 %v644, %v697
    %v706 = vmul.f32 %v646, %v698
    %v707 = vmul.f32 %v648, %v699
    %v708 = vmul.f32 %v650, %v700
    %v709 = vmul.f32 %v652, %v701
    %v710 = vmul.f32 %v654, %v702
    %v711 = vsub.f32 %v703, 0.0078125
    %v712 = vsub.f32 %v704, 0.0078125
    %v713 = vsub.f32 %v705, 0.0078125
    %v714 = vsub.f32 %v706, 0.0078125
    %v715 = vsub.f32 %v707, 0.0078125
    %v716 = vsub.f32 %v708, 0.0078125
    %v717 = vsub.f32 %v709, 0.0078125
    %v718 = vsub.f32 %v710, 0.0078125
    %v719 = vmul.f32 %v711, %v575
    %v720 = vmul.f32 %v712, %v578
    %v721 = vmul.f32 %v713, %v583
    %v722 = vmul.f32 %v714, %v586
    %v723 = vmul.f32 %v715, %v591
    %v724 = vmul.f32 %v716, %v594
    %v725 = vmul.f32 %v717, %v599
    %v726 = vmul.f32 %v718, %v602
    %v727 = vld [vmem:[%s5] sm:$0x1]
    %v729 = vlaneseq
    %v730 = vshrl.u32 %v729, 7
    %v731 = vsub.s32 0, %v730
    %v732 = vrot.slane %v727, %v731
    %v734 = vmul.f32 %v719, %v732
    %v735 = vmul.f32 %v720, %v732
    %v736 = vmul.f32 %v721, %v732
    %v737 = vmul.f32 %v722, %v732
    %v738 = vmul.f32 %v723, %v732
    %v739 = vmul.f32 %v724, %v732
    %v740 = vmul.f32 %v725, %v732
    %v741 = vmul.f32 %v726, %v732
    %742 = vadd.xlane.f32.xlu0 %v734
    %v743 = vpop.xlane.xlu0 %742
    %744 = vadd.xlane.f32.xlu0 %v735
    %v745 = vpop.xlane.xlu0 %744
    %746 = vadd.xlane.f32.xlu0 %v736
    %v747 = vpop.xlane.xlu0 %746
    %748 = vadd.xlane.f32.xlu0 %v737
    %v749 = vpop.xlane.xlu0 %748
    %750 = vadd.xlane.f32.xlu0 %v738
    %v751 = vpop.xlane.xlu0 %750
    %752 = vadd.xlane.f32.xlu0 %v739
    %v753 = vpop.xlane.xlu0 %752
    %754 = vadd.xlane.f32.xlu0 %v740
    %v755 = vpop.xlane.xlu0 %754
    %756 = vadd.xlane.f32.xlu0 %v741
    %v757 = vpop.xlane.xlu0 %756
    %s758 = sld [smem:[#allocation8 + $0x1]]
    %v759 = vstv %s758
    %v760 = vadd.f32 %v743, %v759
    %v761 = vadd.f32 %v745, %v759
    %v762 = vadd.f32 %v747, %v759
    %v763 = vadd.f32 %v749, %v759
    %v764 = vadd.f32 %v751, %v759
    %v765 = vadd.f32 %v753, %v759
    %v766 = vadd.f32 %v755, %v759
    %v767 = vadd.f32 %v757, %v759
    %v768 = vxor.u32 %v760, 2147483648
    %v769 = vxor.u32 %v761, 2147483648
    %v770 = vxor.u32 %v762, 2147483648
    %v771 = vxor.u32 %v763, 2147483648
    %v772 = vxor.u32 %v764, 2147483648
    %v773 = vxor.u32 %v765, 2147483648
    %v774 = vxor.u32 %v766, 2147483648
    %v775 = vxor.u32 %v767, 2147483648
    %v776 = vmul.f32 %v768, 1.442695
    %v777 = vpow.pop %v776
    %v778 = vmul.f32 %v769, 1.442695
    %v779 = vpow.pop %v778
    %v780 = vmul.f32 %v770, 1.442695
    %v781 = vpow.pop %v780
    %v782 = vmul.f32 %v771, 1.442695
    %v783 = vpow.pop %v782
    %v784 = vmul.f32 %v772, 1.442695
    %v785 = vpow.pop %v784
    %v786 = vmul.f32 %v773, 1.442695
    %v787 = vpow.pop %v786
    %v788 = vmul.f32 %v774, 1.442695
    %v789 = vpow.pop %v788
    %v790 = vmul.f32 %v775, 1.442695
    %v791 = vpow.pop %v790
    %v792 = vadd.f32 %v777, 1.0
    %v793 = vadd.f32 %v779, 1.0
    %v794 = vadd.f32 %v781, 1.0
    %v795 = vadd.f32 %v783, 1.0
    %v796 = vadd.f32 %v785, 1.0
    %v797 = vadd.f32 %v787, 1.0
    %v798 = vadd.f32 %v789, 1.0
    %v799 = vadd.f32 %v791, 1.0
    %v800 = vrcp.pop %v792
    %v801 = vmul.f32 1.0, %v800
    %v802 = vrcp.pop %v793
    %v803 = vmul.f32 1.0, %v802
    %v804 = vrcp.pop %v794
    %v805 = vmul.f32 1.0, %v804
    %v806 = vrcp.pop %v795
    %v807 = vmul.f32 1.0, %v806
    %v808 = vrcp.pop %v796
    %v809 = vmul.f32 1.0, %v808
    %v810 = vrcp.pop %v797
    %v811 = vmul.f32 1.0, %v810
    %v812 = vrcp.pop %v798
    %v813 = vmul.f32 1.0, %v812
    %v814 = vrcp.pop %v799
    %v815 = vmul.f32 1.0, %v814
    %v816 = vmul.f32 %v801, 1.99
    %v817 = vmul.f32 %v803, 1.99
    %v818 = vmul.f32 %v805, 1.99
    %v819 = vmul.f32 %v807, 1.99
    %v820 = vmul.f32 %v809, 1.99
    %v821 = vmul.f32 %v811, 1.99
    %v822 = vmul.f32 %v813, 1.99
    %v823 = vmul.f32 %v815, 1.99
    %v824 = vadd.f32 %v816, 0.01
    %v825 = vadd.f32 %v817, 0.01
    %v826 = vadd.f32 %v818, 0.01
    %v827 = vadd.f32 %v819, 0.01
    %v828 = vadd.f32 %v820, 0.01
    %v829 = vadd.f32 %v821, 0.01
    %v830 = vadd.f32 %v822, 0.01
    %v831 = vadd.f32 %v823, 0.01
    %vm832 = vcmask 7168
    %833 = vst.msk [vmem:[%s7] sm:$0xff] %vm832, %v824
    %834 = vst.msk [vmem:[%s7 + $0x8] sm:$0xff] %vm832, %v825
    %835 = vst.msk [vmem:[%s7 + $0x10] sm:$0xff] %vm832, %v826
    %836 = vst.msk [vmem:[%s7 + $0x18] sm:$0xff] %vm832, %v827
    %837 = vst.msk [vmem:[%s7 + $0x20] sm:$0xff] %vm832, %v828
    %838 = vst.msk [vmem:[%s7 + $0x28] sm:$0xff] %vm832, %v829
    %839 = vst.msk [vmem:[%s7 + $0x30] sm:$0xff] %vm832, %v830
    %840 = vst.msk [vmem:[%s7 + $0x38] sm:$0xff] %vm832, %v831
    // Predicated region
    $region46: #{tpu_custom_call.1} parent=1 // pred_check
      _
    $region47: #{tpu_custom_call.1} parent=1 // pred_check_branch
      %842 = sbr.rel (0) target = $region49
    $region48: #{tpu_custom_call.1} parent=1 // pred_region
      _
    $region49: #{tpu_custom_call.1} parent=1 // pred_fallthru
      _
    // Predicated region
    $region50: #{tpu_custom_call.1} parent=1 // pred_check
      _
    $region51: #{tpu_custom_call.1} parent=1 // pred_check_branch
      %844 = sbr.rel (0) target = $region53
    $region52: #{tpu_custom_call.1} parent=1 // pred_region
      _
    $region53: #{tpu_custom_call.1} parent=1 // pred_fallthru
      _
    %845 = vsyncpa [#allocation3], 1
    %846 = vsyncpa [#allocation6], 1
    %847 = vsyncpa [#allocation4], 1

</llo_original>
